<compile_context>
chip_gen: v6e
topology: v6e:2x2x1
jax: 0.10.0
libtpu: 0.0.40
codegen_flags: <defaults>
</compile_context>

<pallas_src>
import functools

import jax
import jax.numpy as jnp
from jax.experimental import pallas as pl
from jax.experimental.pallas import tpu as pltpu

EPSILON = 1e-07
LANES = 128

# VMEM-resident path: cap on the f32 working-slab size.  slab + output + a
# couple of f32 temporaries stays well under the 32 MiB scoped-VMEM budget we
# request (128 MiB physical on v5e/v6e, 64 MiB on v7x).
SMALL_MAX_F32_BYTES = 6 * 1024 * 1024

# Gridded path: ~2 MiB f32 tiles (mem-bound kernels reach ~85% of HBM roofline
# at 1-4 MiB tiles; double-buffered in+out is ~8 MiB -> fits all generations).
TARGET_TILE_F32_BYTES = 2 * 1024 * 1024
MAX_TILE_ROWS = 4096

# Leading "parallel" grid axis on the stats pass (v7x has 2 TensorCores).
NSPLIT = 2

VMEM_LIMIT_BYTES = 32 * 1024 * 1024


# --------------------------------------------------------------------------
# VMEM-resident kernel (small inputs): whole (R, L) slab in VMEM.
# Two-pass mean/variance (matches the PyTorch reference numerics exactly),
# fused normalize+affine.
# --------------------------------------------------------------------------
def _iln_resident_kernel(x_ref, g_ref, b_ref, o_ref):
    x = x_ref[...].astype(jnp.float32)
    inv_n = 1.0 / x.size                          # static Python float
    mean = jnp.sum(x) * inv_n
    sub = x - mean
    var = jnp.sum(sub * sub) * inv_n
    inv_std = jax.lax.rsqrt(var + EPSILON)        # EUP
    scale = g_ref[...].astype(jnp.float32) * inv_std        # (1, L)
    shift = b_ref[...].astype(jnp.float32) - mean * scale   # (1, L)
    o_ref[...] = (x * scale + shift).astype(o_ref.dtype)


def _iln_resident(x2d, g_row, b_row):
    return pl.pallas_call(
        _iln_resident_kernel,
        out_shape=jax.ShapeDtypeStruct(x2d.shape, x2d.dtype),
        in_specs=[
            pl.BlockSpec(memory_space=pltpu.VMEM),
            pl.BlockSpec(memory_space=pltpu.VMEM),
            pl.BlockSpec(memory_space=pltpu.VMEM),
        ],
        out_specs=pl.BlockSpec(memory_space=pltpu.VMEM),
        compiler_params=pltpu.CompilerParams(
            vmem_limit_bytes=VMEM_LIMIT_BYTES),
    )(x2d, g_row, b_row)


# --------------------------------------------------------------------------
# Gridded path, pass 1: lane-partial sum / sum-of-squares accumulation.
#   acc_ref block: (1, 2, 8, L)  ->  [split, {sum, sumsq}, sublane, lane]
#   Ragged tail (and any clamped out-of-range tile) is masked by logical row
#   index, so no padded copy of x is ever materialized.
# --------------------------------------------------------------------------
def _stats_kernel(x_ref, acc_ref, *, rows, tile_rows, tiles_per_split):
    i = pl.program_id(1)

    @pl.when(i == 0)
    def _():
        acc_ref[...] = jnp.zeros_like(acc_ref)

    g = pl.program_id(0) * tiles_per_split + i        # logical (unclamped) tile
    x = x_ref[...].astype(jnp.float32)
    row = g * tile_rows + jax.lax.broadcasted_iota(jnp.int32, x.shape, 0)
    x = jnp.where(row < rows, x, 0.0)

    # Fold sublane groups with pure VPU adds; keep (8, L) lane partials so the
    # single cross-lane reduce happens once, in the epilogue.
    xp = x.reshape(tile_rows // 8, 8, x.shape[1])
    acc_ref[0, 0] += jnp.sum(xp, axis=0)
    acc_ref[0, 1] += jnp.sum(xp * xp, axis=0)


# --------------------------------------------------------------------------
# Gridded path, pass 2: fused elementwise normalize (x * scale + shift).
# --------------------------------------------------------------------------
def _norm_kernel(x_ref, scale_ref, shift_ref, o_ref):
    x = x_ref[...].astype(jnp.float32)
    o_ref[...] = (x * scale_ref[...] + shift_ref[...]).astype(o_ref.dtype)


def _iln_gridded(x2d, g_row, b_row):
    R, L = x2d.shape
    tile_rows = (TARGET_TILE_F32_BYTES // (4 * L)) // 8 * 8
    tile_rows = max(8, min(MAX_TILE_ROWS, tile_rows))
    num_tiles = pl.cdiv(R, tile_rows)
    tiles_per_split = pl.cdiv(num_tiles, NSPLIT)

    def x_stats_map(c, i):
        # Clamp out-of-range logical tiles (only possible when num_tiles is not
        # a multiple of NSPLIT); their contribution is fully masked in-kernel.
        g = c * tiles_per_split + i
        return (jnp.minimum(g, num_tiles - 1), 0)

    stats = pl.pallas_call(
        functools.partial(_stats_kernel, rows=R, tile_rows=tile_rows,
                          tiles_per_split=tiles_per_split),
        out_shape=jax.ShapeDtypeStruct((NSPLIT, 2, 8, L), jnp.float32),
        grid=(NSPLIT, tiles_per_split),
        in_specs=[pl.BlockSpec((tile_rows, L), x_stats_map)],
        out_specs=pl.BlockSpec((1, 2, 8, L), lambda c, i: (c, 0, 0, 0)),
        compiler_params=pltpu.CompilerParams(
            dimension_semantics=("parallel", "arbitrary"),
            vmem_limit_bytes=VMEM_LIMIT_BYTES),
    )(x2d)

    # Tiny scalar/vector epilogue in plain JAX: mean, inv_std, scale, shift.
    # NOTE: E[x^2] - mean^2 (clamped at 0); the (8, L) lane-partial accumulators
    # keep summation error small vs. funneling every add into one f32 scalar.
    inv_n = 1.0 / float(R * L)
    s = jnp.sum(stats[:, 0])
    sq = jnp.sum(stats[:, 1])
    mean = s * inv_n
    var = jnp.maximum(sq * inv_n - mean * mean, 0.0)
    inv_std = jax.lax.rsqrt(var + EPSILON)
    scale = g_row.astype(jnp.float32) * inv_std          # (1, L)
    shift = b_row.astype(jnp.float32) - mean * scale     # (1, L)

    # Pass 2: streamed, megacore-shardable fused normalize.  The ragged final
    # tile is handled by Pallas boundary clipping (OOB writes are dropped), so
    # no output slicing / copies are needed.
    return pl.pallas_call(
        _norm_kernel,
        out_shape=jax.ShapeDtypeStruct(x2d.shape, x2d.dtype),
        grid=(num_tiles,),
        in_specs=[
            pl.BlockSpec((tile_rows, L), lambda i: (i, 0)),
            pl.BlockSpec((1, L), lambda i: (0, 0)),
            pl.BlockSpec((1, L), lambda i: (0, 0)),
        ],
        out_specs=pl.BlockSpec((tile_rows, L), lambda i: (i, 0)),
        compiler_params=pltpu.CompilerParams(
            dimension_semantics=("parallel",),
            vmem_limit_bytes=VMEM_LIMIT_BYTES),
    )(x2d, scale, shift)


def instant_layer_norm(x, gamma, beta):
    """x: (B, T, C); gamma, beta: (1, 1, C).  Matches the PyTorch module."""
    B, T, C = x.shape
    total = B * T * C

    if C <= LANES and LANES % C == 0 and total % LANES == 0:
        # Small channel counts dividing 128: flatten to a lane-dense
        # (total/128, 128) view and tile gamma/beta across the 128 lanes.
        reps = LANES // C
        g_row = jnp.tile(gamma.reshape(-1), reps).reshape(1, LANES)
        b_row = jnp.tile(beta.reshape(-1), reps).reshape(1, LANES)
        x2d = x.reshape(total // LANES, LANES)
    else:
        # Any channel count: (B*T, C) rows with gamma/beta as (1, C).
        # Lane-dense whenever C % 128 == 0 (e.g. 256/512).
        # TODO(synk): C that neither divides nor is a multiple of 128 still
        # uses masked partial-lane stores; an lcm(C,128)-tiled gamma slab would
        # make those lane-dense as well.
        g_row = gamma.reshape(1, C)
        b_row = beta.reshape(1, C)
        x2d = x.reshape(B * T, C)

    if x2d.size * 4 <= SMALL_MAX_F32_BYTES:
        out2d = _iln_resident(x2d, g_row, b_row)
    else:
        out2d = _iln_gridded(x2d, g_row, b_row)
    return out2d.reshape(x.shape)


def _reference(x, gamma, beta):
    xf = x.astype(jnp.float32)
    mean = jnp.mean(xf)
    sub = xf - mean
    variance = jnp.mean(jnp.square(sub))
    std = jnp.sqrt(variance + EPSILON)
    return (sub / std * gamma + beta).astype(x.dtype)


if __name__ == "__main__":
    key = jax.random.PRNGKey(0)
    k1, k2, k3 = jax.random.split(key, 3)

    # --- Small shape consistent with the module's (batch, seq, channels) use.
    B, T, C = 2, 8, 32
    x = jax.random.normal(k1, (B, T, C), dtype=jnp.float32)
    gamma = jnp.ones((1, 1, C), dtype=jnp.float32)   # module init: ones
    beta = jnp.zeros((1, 1, C), dtype=jnp.float32)   # module init: zeros
    out = jax.block_until_ready(instant_layer_norm(x, gamma, beta))
    ref = _reference(x, gamma, beta)
    assert out.shape == x.shape and out.dtype == x.dtype
    assert jnp.allclose(out, ref, atol=1e-5, rtol=1e-5)

    # --- DTLN-like unaligned channel count (C=257): (B*T, C) view, resident.
    B1, T1, C1 = 2, 63, 257
    x1 = jax.random.normal(k1, (B1, T1, C1), dtype=jnp.float32)
    g1 = 1.0 + 0.1 * jax.random.normal(k2, (1, 1, C1), dtype=jnp.float32)
    b1 = 0.1 * jax.random.normal(k3, (1, 1, C1), dtype=jnp.float32)
    out1 = jax.block_until_ready(instant_layer_norm(x1, g1, b1))
    ref1 = _reference(x1, g1, b1)
    assert out1.shape == x1.shape and out1.dtype == x1.dtype
    assert jnp.allclose(out1, ref1, atol=1e-4, rtol=1e-4)

    # --- Gridded path with odd tile count + ragged tail (clamp & row masking):
    #     rows = 8*2049 = 16392 -> 5 tiles of 4096 rows, split across 2.
    B2, T2, C2 = 8, 2049, 128
    x2 = jax.random.normal(k1, (B2, T2, C2), dtype=jnp.float32)
    g2 = 1.0 + 0.1 * jax.random.normal(k2, (1, 1, C2), dtype=jnp.float32)
    b2 = 0.1 * jax.random.normal(k3, (1, 1, C2), dtype=jnp.float32)
    out2 = jax.block_until_ready(instant_layer_norm(x2, g2, b2))
    ref2 = _reference(x2, g2, b2)
    assert out2.shape == x2.shape and out2.dtype == x2.dtype
    assert jnp.allclose(out2, ref2, atol=1e-4, rtol=1e-4)

    print("KERNEL_OK")
</pallas_src>

<mosaic_0001>
module attributes {stable_mosaic.version = 11 : i64} {
  func.func @_iln_resident_kernel(%arg0: memref<4x128xf32, #tpu.memory_space<vmem>>, %arg1: memref<1x128xf32, #tpu.memory_space<vmem>>, %arg2: memref<1x128xf32, #tpu.memory_space<vmem>>, %arg3: memref<4x128xf32, #tpu.memory_space<vmem>>) attributes {dimension_semantics = [], scalar_prefetch = 0 : i64, scratch_operands = 0 : i64, tpu.core_type = #tpu.core_type<tc>} {
    %c0 = arith.constant 0 : index
    %c0_0 = arith.constant 0 : index
    %0 = vector.load %arg0[%c0, %c0_0] : memref<4x128xf32, #tpu.memory_space<vmem>>, vector<4x128xf32>
    %1 = vector.shape_cast %0 : vector<4x128xf32> to vector<1x4x128xf32>
    %cst = arith.constant dense<0.000000e+00> : vector<1xf32>
    %2 = vector.multi_reduction <add>, %1, %cst [1, 2] : vector<1x4x128xf32> to vector<1xf32>
    %3 = vector.shape_cast %2 : vector<1xf32> to vector<1x1x1xf32>
    %4 = vector.extract %3[0, 0, 0] : f32 from vector<1x1x1xf32>
    %cst_1 = arith.constant 0.001953125 : f32
    %5 = arith.mulf %4, %cst_1 : f32
    %6 = vector.broadcast %5 : f32 to vector<4x128xf32>
    %7 = arith.subf %0, %6 : vector<4x128xf32>
    %8 = arith.mulf %7, %7 : vector<4x128xf32>
    %9 = vector.shape_cast %8 : vector<4x128xf32> to vector<1x4x128xf32>
    %cst_2 = arith.constant dense<0.000000e+00> : vector<1xf32>
    %10 = vector.multi_reduction <add>, %9, %cst_2 [1, 2] : vector<1x4x128xf32> to vector<1xf32>
    %11 = vector.shape_cast %10 : vector<1xf32> to vector<1x1x1xf32>
    %12 = vector.extract %11[0, 0, 0] : f32 from vector<1x1x1xf32>
    %cst_3 = arith.constant 0.001953125 : f32
    %13 = arith.mulf %12, %cst_3 : f32
    %cst_4 = arith.constant 1.000000e-07 : f32
    %14 = arith.addf %13, %cst_4 : f32
    %15 = math.rsqrt %14 : f32
    %c0_5 = arith.constant 0 : index
    %c0_6 = arith.constant 0 : index
    %16 = vector.load %arg1[%c0_5, %c0_6] : memref<1x128xf32, #tpu.memory_space<vmem>>, vector<1x128xf32>
    %17 = vector.broadcast %15 : f32 to vector<1x128xf32>
    %18 = arith.mulf %16, %17 : vector<1x128xf32>
    %c0_7 = arith.constant 0 : index
    %c0_8 = arith.constant 0 : index
    %19 = vector.load %arg2[%c0_7, %c0_8] : memref<1x128xf32, #tpu.memory_space<vmem>>, vector<1x128xf32>
    %20 = vector.broadcast %5 : f32 to vector<1x128xf32>
    %21 = arith.mulf %20, %18 : vector<1x128xf32>
    %22 = arith.subf %19, %21 : vector<1x128xf32>
    %23 = vector.broadcast %18 : vector<1x128xf32> to vector<4x128xf32>
    %24 = arith.mulf %0, %23 : vector<4x128xf32>
    %25 = vector.broadcast %22 : vector<1x128xf32> to vector<4x128xf32>
    %26 = arith.addf %24, %25 : vector<4x128xf32>
    %c0_9 = arith.constant 0 : index
    %c0_10 = arith.constant 0 : index
    %27 = vector.load %arg3[%c0_9, %c0_10] : memref<4x128xf32, #tpu.memory_space<vmem>>, vector<4x128xf32>
    tpu.vector_store %arg3[%c0_9, %c0_10], %26 {strides = array<i32>} : memref<4x128xf32, #tpu.memory_space<vmem>>, vector<4x128xf32>,
    return
  }
}

</mosaic_0001>

<llo_original>
// kernel: tpu_custom_call.1
$region0: #{tpu_custom_call.1}
  #allocation0 [shape = 'u32[]', space=smem, size = 0x4, offset = 0x4, fixed_abs, tag = 'smem constant byte address 0x4 - core index']
  #allocation1 [shape = 'u32[144,128]{1,0:T(1,128)}', space=vmem, size = 0x12000, scoped, tag = 'internal scratch']
  %s0 = inlined_call_operand.hbm [shape: f32[4,128], index: 0, kind: input, shape index: {}]
  %s1 = inlined_call_operand.vmem [shape: f32[1,128], index: 1, kind: input, shape index: {}]
  %s2 = inlined_call_operand.vmem [shape: f32[1,128], index: 2, kind: input, shape index: {}]
  %s3 = inlined_call_operand.hbm [shape: f32[4,128], index: 3, kind: output, shape index: {}]
  %s4 = sld [smem:[#allocation0]]
  $region26: #{tpu_custom_call.1} parent=0
    _
  %s6 = ssub.s32 1, %s4
  %s7 = scalar_select 0, %s6, %s4
  $region1: #{tpu_custom_call.1} parent=0
    #allocation2 [shape = 'u8[2048]{0}', space=vmem, size = 0x800, scoped, tag = 'input window, operand 0, single buffered']
    #allocation3 [shape = 's32[1]{0}', space=sflag, size = 0x4, scoped, tag = 'scoped memory for tpu_custom_call.1']
    #allocation4 [shape = 's32[1]{0}', space=sflag, size = 0x4, scoped, tag = 'scoped memory for tpu_custom_call.1']
    #allocation5 [shape = 'u8[2048]{0}', space=vmem, size = 0x800, scoped, tag = 'output window, operand 0, single buffered']
    %8 = vsyncpa [#allocation3], 0
    %9 = vsyncpa [#allocation4], 0
    // Predicated region
    $region2: #{tpu_custom_call.1} parent=1 // pred_check
      _
    $region3: #{tpu_custom_call.1} parent=1 // pred_check_branch
      %11 = sbr.rel (0) target = $region5
    $region4: #{tpu_custom_call.1} parent=1 // pred_region
      %s13 = ssub.s32 64, 64
      %14 = vsyncadd [#allocation3], %s13
      %s16 = sshll.u32 [#allocation2], 4
      %s17 = int_to_ptr.vmem [resolvable:$true] %s16
      %19 = dma.hbm_to_vmem [thread:$0]  %s0, 64, %s17, [#allocation3]
    $region5: #{tpu_custom_call.1} parent=1 // pred_fallthru
      _
    // Predicated region
    $region6: #{tpu_custom_call.1} parent=1 // pred_check
      _
    $region7: #{tpu_custom_call.1} parent=1 // pred_check_branch
      %21 = sbr.rel (0) target = $region9
    $region8: #{tpu_custom_call.1} parent=1 // pred_region
      _
    $region9: #{tpu_custom_call.1} parent=1 // pred_fallthru
      _
    // Predicated region
    $region10: #{tpu_custom_call.1} parent=1 // pred_check
      _
    $region11: #{tpu_custom_call.1} parent=1 // pred_check_branch
      %23 = sbr.rel (0) target = $region13
    $region12: #{tpu_custom_call.1} parent=1 // pred_region
      _
    $region13: #{tpu_custom_call.1} parent=1 // pred_fallthru
      _
    // Predicated region
    $region14: #{tpu_custom_call.1} parent=1 // pred_check
      _
    $region15: #{tpu_custom_call.1} parent=1 // pred_check_branch
      %25 = sbr.rel (0) target = $region17
    $region16: #{tpu_custom_call.1} parent=1 // pred_region
      %26 = dma.done [#allocation3], 64
    $region17: #{tpu_custom_call.1} parent=1 // pred_fallthru
      _
    %v27 = vld [vmem:[#allocation2] sm:$0xf]
    %vm28 = vcmask 1043456
    %v29 = vsel %vm28, %v27, 0.0
    %30 = vadd.xlane.f32.xlu0 %v29
    %v31 = vpop.xlane.xlu0 %30
    %v32 = vrot.slane %v31, 4
    %v33 = vadd.f32 %v31, %v32
    %v34 = vrot.slane %v33, 2
    %v35 = vadd.f32 %v33, %v34
    %v36 = vrot.slane %v35, 1
    %v37 = vadd.f32 %v35, %v36
    %s38 = vtos %v37
    %s39 = smul.f32 %s38, 0.001953125
    %v40 = vstv %s39
    %v41 = vsub.f32 %v27, %v40
    %v42 = vmul.f32 %v41, %v41
    %v43 = vsel %vm28, %v42, 0.0
    %44 = vadd.xlane.f32.xlu0 %v43
    %v45 = vpop.xlane.xlu0 %44
    %v46 = vrot.slane %v45, 4
    %v47 = vadd.f32 %v45, %v46
    %v48 = vrot.slane %v47, 2
    %v49 = vadd.f32 %v47, %v48
    %v50 = vrot.slane %v49, 1
    %v51 = vadd.f32 %v49, %v50
    %s52 = vtos %v51
    %s53 = smul.f32 %s52, 0.001953125
    %s54 = sadd.f32 %s53, 1e-07
    %v55 = vstv %s54
    %v56 = vrsqrt.pop %v55
    %s57 = vtos %v56
    %v58 = vld [vmem:[%s1] sm:$0x1]
    %v59 = vstv %s57
    %v60 = vmul.f32 %v58, %v59
    %v61 = vld [vmem:[%s2] sm:$0x1]
    %v62 = vmul.f32 %v40, %v60
    %v63 = vsub.f32 %v61, %v62
    %v65 = vlaneseq
    %v66 = vshrl.u32 %v65, 7
    %v67 = vsub.s32 0, %v66
    %v68 = vrot.slane %v60, %v67
    %v70 = vmul.f32 %v27, %v68
    %v72 = vlaneseq
    %v73 = vshrl.u32 %v72, 7
    %v74 = vsub.s32 0, %v73
    %v75 = vrot.slane %v63, %v74
    %v77 = vadd.f32 %v70, %v75
    %78 = vst [vmem:[#allocation5] sm:$0xf] %v77
    // Predicated region
    $region18: #{tpu_custom_call.1} parent=1 // pred_check
      _
    $region19: #{tpu_custom_call.1} parent=1 // pred_check_branch
      %80 = sbr.rel (0) target = $region21
    $region20: #{tpu_custom_call.1} parent=1 // pred_region
      %s82 = ssub.s32 64, 64
      %83 = vsyncadd [#allocation4], %s82
      %s85 = sshll.u32 [#allocation5], 4
      %s86 = int_to_ptr.vmem [resolvable:$true] %s85
      %88 = dma.vmem_to_hbm [thread:$0]  %s86, 64, %s3, [#allocation4]
    $region21: #{tpu_custom_call.1} parent=1 // pred_fallthru
      _
    // Predicated region
    $region22: #{tpu_custom_call.1} parent=1 // pred_check
      _
    $region23: #{tpu_custom_call.1} parent=1 // pred_check_branch
      %90 = sbr.rel (0) target = $region25
    $region24: #{tpu_custom_call.1} parent=1 // pred_region
      %91 = dma.done [#allocation4], 64
    $region25: #{tpu_custom_call.1} parent=1 // pred_fallthru
      _
    %92 = vsyncpa [#allocation3], 1
    %93 = vsyncpa [#allocation4], 1

</llo_original>
